<compile_context>
chip_gen: v7x
topology: tpu7x:2x2x1
jax: 0.10.0
libtpu: 0.0.40
codegen_flags: <defaults>
</compile_context>

<pallas_src>
import jax
import jax.numpy as jnp
from jax import lax
from jax.experimental import pallas as pl
from jax.experimental.pallas import tpu as pltpu

_LANE = 128
_SUBLANE = 8


def defixmatch_text_kernel(text_ref, fused_ref, bias_ref, out_ref):
    """out[b, :] = (1/L) * sum_l fused[text[b, l], :] + bias, fused = emb @ W^T."""
    Bt, L = text_ref.shape
    Vp = fused_ref.shape[0]
    inv_len = 1.0 / L  # static: EmbeddingBag(mode='mean') on full-length 2D bags

    text = text_ref[...]                                        # [Bt, L] int32
    vocab_iota = lax.broadcasted_iota(jnp.int32, (Bt, Vp), 1)   # [Bt, Vp]

    # Integer-valued token counts built as a short unrolled loop of 2-D
    # compares (no 3-D temporary, no cross-sublane reduce).
    counts = jnp.zeros((Bt, Vp), jnp.float32)
    for l in range(L):
        tok = text[:, l:l + 1]                                  # [Bt, 1]
        counts = counts + jnp.where(vocab_iota == tok, 1.0, 0.0)

    # Single fused matmul on the MXU (K = Vp = 128), f32 accumulation.
    acc = jnp.dot(counts, fused_ref[...],
                  preferred_element_type=jnp.float32)           # [Bt, C]
    # Exact mean: scale the f32 accumulator, then add the f32 bias.
    out_ref[...] = acc * inv_len + bias_ref[...]


def defixmatch_text_forward(text, emb, w, b, *, block_b=512):
    """Forward pass of DeFixMatchTextModel.

    text: [B, L] int32 token ids (each row = one mean-pooled bag)
    emb : [V, D] f32 embedding table
    w   : [C, D] f32 Linear weight (PyTorch layout)
    b   : [C]    f32 Linear bias
    returns [B, C] f32 logits
    """
    B, L = text.shape
    V, D = emb.shape
    C = w.shape[0]

    # Algebraic fusion: counts @ (emb @ W^T).  Keep the tiny fused table in f32.
    fused = (emb @ w.T).astype(jnp.float32)                     # [V, C]

    # Pad the vocab (contraction) dim to a multiple of 128 lanes.
    Vp = max(_LANE, pl.cdiv(V, _LANE) * _LANE)
    fused_p = jnp.zeros((Vp, C), jnp.float32).at[:V, :].set(fused)
    bias2d = b.reshape(1, C).astype(jnp.float32)

    # Adaptive batch tiling: single tile for tiny B, >= 2 tiles once B is big
    # enough (so v7x's 2 TensorCores both get work), capped at block_b.
    if B <= 2 * _SUBLANE:
        Bt = pl.cdiv(B, _SUBLANE) * _SUBLANE
    else:
        per_core = pl.cdiv(pl.cdiv(B, 2), _SUBLANE) * _SUBLANE
        Bt = max(_SUBLANE, min((block_b // _SUBLANE) * _SUBLANE, per_core))
    B_pad = pl.cdiv(B, Bt) * Bt

    if B_pad != B:
        text_in = jnp.zeros((B_pad, L), jnp.int32).at[:B, :].set(text.astype(jnp.int32))
    else:
        text_in = text.astype(jnp.int32)

    out_p = pl.pallas_call(
        defixmatch_text_kernel,
        out_shape=jax.ShapeDtypeStruct((B_pad, C), jnp.float32),
        grid_spec=pltpu.PrefetchScalarGridSpec(
            num_scalar_prefetch=0,
            grid=(B_pad // Bt,),
            in_specs=[
                pl.BlockSpec((Bt, L), lambda i: (i, 0)),    # batch-tiled token ids
                pl.BlockSpec((Vp, C), lambda i: (0, 0)),    # fused [Vp, C] table, VMEM-resident
                pl.BlockSpec((1, C), lambda i: (0, 0)),     # bias, VMEM-resident
            ],
            out_specs=pl.BlockSpec((Bt, C), lambda i: (i, 0)),
        ),
        compiler_params=pltpu.CompilerParams(
            dimension_semantics=("parallel",)),
    )(text_in, fused_p, bias2d)

    return out_p if B_pad == B else out_p[:B]


def reference_forward(text, emb, w, b):
    # Pure-JAX reference of EmbeddingBag(mean) + Linear, all in f32.
    pooled = jnp.mean(emb[text], axis=1)           # [B, D]
    return pooled @ w.T + b                        # [B, C]


if __name__ == "__main__":
    key = jax.random.PRNGKey(0)
    k_emb, k_w, k_b, k_txt = jax.random.split(key, 4)

    # Small shapes consistent with the module: vocab=32, embed_dim=64, classes=4
    vocab_size, embed_dim, num_classes = 32, 64, 4
    batch, seq = 2, 8

    emb = jax.random.normal(k_emb, (vocab_size, embed_dim), dtype=jnp.float32)
    w = jax.random.uniform(k_w, (num_classes, embed_dim), dtype=jnp.float32,
                           minval=-0.125, maxval=0.125)  # nn.Linear weight [C, D]
    b = jax.random.uniform(k_b, (num_classes,), dtype=jnp.float32,
                           minval=-0.125, maxval=0.125)
    text = jax.random.randint(k_txt, (batch, seq), 0, vocab_size, dtype=jnp.int32)

    out = defixmatch_text_forward(text, emb, w, b)
    out = jax.block_until_ready(out)

    ref = reference_forward(text, emb, w, b)
    assert out.shape == (batch, num_classes)
    # f32 fused table + exact integer counts + f32 mean -> tight agreement.
    assert jnp.allclose(out, ref, atol=1e-2, rtol=1e-2), (out, ref)

    print("KERNEL_OK")
</pallas_src>

<mosaic_0001>
module attributes {stable_mosaic.version = 11 : i64} {
  func.func @defixmatch_text_kernel(%arg0: i32, %arg1: memref<8x8xi32, #tpu.memory_space<vmem>>, %arg2: memref<128x4xf32, #tpu.memory_space<vmem>>, %arg3: memref<1x4xf32, #tpu.memory_space<vmem>>, %arg4: memref<8x4xf32, #tpu.memory_space<vmem>>) attributes {dimension_semantics = [#tpu.dimension_semantics<parallel>], iteration_bounds = array<i64: 1>, scalar_prefetch = 0 : i64, scratch_operands = 0 : i64, tpu.core_type = #tpu.core_type<tc>, window_params = [{transform_indices = @transform_0, window_bounds = array<i64: 8, 8>}, {pipeline_mode = #tpu.pipeline_mode<synchronous>, transform_indices = @transform_1, window_bounds = array<i64: 128, 4>}, {pipeline_mode = #tpu.pipeline_mode<synchronous>, transform_indices = @transform_2, window_bounds = array<i64: 1, 4>}, {transform_indices = @transform_3, window_bounds = array<i64: 8, 4>}]} {
    %c0 = arith.constant 0 : index
    %c0_0 = arith.constant 0 : index
    %0 = vector.load %arg1[%c0, %c0_0] : memref<8x8xi32, #tpu.memory_space<vmem>>, vector<8x8xi32>
    %1 = tpu.iota {dimensions = array<i32: 1>} : vector<8x128xi32>
    %cst = arith.constant 0.000000e+00 : f32
    %2 = vector.broadcast %cst : f32 to vector<8x128xf32>
    %3 = vector.extract_strided_slice %0 {offsets = [0, 0], sizes = [8, 1], strides = [1, 1]} : vector<8x8xi32> to vector<8x1xi32>
    %4 = vector.broadcast %3 : vector<8x1xi32> to vector<8x128xi32>
    %5 = arith.cmpi eq, %1, %4 : vector<8x128xi32>
    %cst_1 = arith.constant 1.000000e+00 : f32
    %cst_2 = arith.constant 0.000000e+00 : f32
    %6 = vector.broadcast %cst_1 : f32 to vector<8x128xf32>
    %7 = vector.broadcast %cst_2 : f32 to vector<8x128xf32>
    %8 = arith.select %5, %6, %7 : vector<8x128xi1>, vector<8x128xf32>
    %9 = arith.addf %2, %8 : vector<8x128xf32>
    %10 = vector.extract_strided_slice %0 {offsets = [0, 1], sizes = [8, 1], strides = [1, 1]} : vector<8x8xi32> to vector<8x1xi32>
    %11 = vector.broadcast %10 : vector<8x1xi32> to vector<8x128xi32>
    %12 = arith.cmpi eq, %1, %11 : vector<8x128xi32>
    %cst_3 = arith.constant 1.000000e+00 : f32
    %cst_4 = arith.constant 0.000000e+00 : f32
    %13 = vector.broadcast %cst_3 : f32 to vector<8x128xf32>
    %14 = vector.broadcast %cst_4 : f32 to vector<8x128xf32>
    %15 = arith.select %12, %13, %14 : vector<8x128xi1>, vector<8x128xf32>
    %16 = arith.addf %9, %15 : vector<8x128xf32>
    %17 = vector.extract_strided_slice %0 {offsets = [0, 2], sizes = [8, 1], strides = [1, 1]} : vector<8x8xi32> to vector<8x1xi32>
    %18 = vector.broadcast %17 : vector<8x1xi32> to vector<8x128xi32>
    %19 = arith.cmpi eq, %1, %18 : vector<8x128xi32>
    %cst_5 = arith.constant 1.000000e+00 : f32
    %cst_6 = arith.constant 0.000000e+00 : f32
    %20 = vector.broadcast %cst_5 : f32 to vector<8x128xf32>
    %21 = vector.broadcast %cst_6 : f32 to vector<8x128xf32>
    %22 = arith.select %19, %20, %21 : vector<8x128xi1>, vector<8x128xf32>
    %23 = arith.addf %16, %22 : vector<8x128xf32>
    %24 = vector.extract_strided_slice %0 {offsets = [0, 3], sizes = [8, 1], strides = [1, 1]} : vector<8x8xi32> to vector<8x1xi32>
    %25 = vector.broadcast %24 : vector<8x1xi32> to vector<8x128xi32>
    %26 = arith.cmpi eq, %1, %25 : vector<8x128xi32>
    %cst_7 = arith.constant 1.000000e+00 : f32
    %cst_8 = arith.constant 0.000000e+00 : f32
    %27 = vector.broadcast %cst_7 : f32 to vector<8x128xf32>
    %28 = vector.broadcast %cst_8 : f32 to vector<8x128xf32>
    %29 = arith.select %26, %27, %28 : vector<8x128xi1>, vector<8x128xf32>
    %30 = arith.addf %23, %29 : vector<8x128xf32>
    %31 = vector.extract_strided_slice %0 {offsets = [0, 4], sizes = [8, 1], strides = [1, 1]} : vector<8x8xi32> to vector<8x1xi32>
    %32 = vector.broadcast %31 : vector<8x1xi32> to vector<8x128xi32>
    %33 = arith.cmpi eq, %1, %32 : vector<8x128xi32>
    %cst_9 = arith.constant 1.000000e+00 : f32
    %cst_10 = arith.constant 0.000000e+00 : f32
    %34 = vector.broadcast %cst_9 : f32 to vector<8x128xf32>
    %35 = vector.broadcast %cst_10 : f32 to vector<8x128xf32>
    %36 = arith.select %33, %34, %35 : vector<8x128xi1>, vector<8x128xf32>
    %37 = arith.addf %30, %36 : vector<8x128xf32>
    %38 = vector.extract_strided_slice %0 {offsets = [0, 5], sizes = [8, 1], strides = [1, 1]} : vector<8x8xi32> to vector<8x1xi32>
    %39 = vector.broadcast %38 : vector<8x1xi32> to vector<8x128xi32>
    %40 = arith.cmpi eq, %1, %39 : vector<8x128xi32>
    %cst_11 = arith.constant 1.000000e+00 : f32
    %cst_12 = arith.constant 0.000000e+00 : f32
    %41 = vector.broadcast %cst_11 : f32 to vector<8x128xf32>
    %42 = vector.broadcast %cst_12 : f32 to vector<8x128xf32>
    %43 = arith.select %40, %41, %42 : vector<8x128xi1>, vector<8x128xf32>
    %44 = arith.addf %37, %43 : vector<8x128xf32>
    %45 = vector.extract_strided_slice %0 {offsets = [0, 6], sizes = [8, 1], strides = [1, 1]} : vector<8x8xi32> to vector<8x1xi32>
    %46 = vector.broadcast %45 : vector<8x1xi32> to vector<8x128xi32>
    %47 = arith.cmpi eq, %1, %46 : vector<8x128xi32>
    %cst_13 = arith.constant 1.000000e+00 : f32
    %cst_14 = arith.constant 0.000000e+00 : f32
    %48 = vector.broadcast %cst_13 : f32 to vector<8x128xf32>
    %49 = vector.broadcast %cst_14 : f32 to vector<8x128xf32>
    %50 = arith.select %47, %48, %49 : vector<8x128xi1>, vector<8x128xf32>
    %51 = arith.addf %44, %50 : vector<8x128xf32>
    %52 = vector.extract_strided_slice %0 {offsets = [0, 7], sizes = [8, 1], strides = [1, 1]} : vector<8x8xi32> to vector<8x1xi32>
    %53 = vector.broadcast %52 : vector<8x1xi32> to vector<8x128xi32>
    %54 = arith.cmpi eq, %1, %53 : vector<8x128xi32>
    %cst_15 = arith.constant 1.000000e+00 : f32
    %cst_16 = arith.constant 0.000000e+00 : f32
    %55 = vector.broadcast %cst_15 : f32 to vector<8x128xf32>
    %56 = vector.broadcast %cst_16 : f32 to vector<8x128xf32>
    %57 = arith.select %54, %55, %56 : vector<8x128xi1>, vector<8x128xf32>
    %58 = arith.addf %51, %57 : vector<8x128xf32>
    %c0_17 = arith.constant 0 : index
    %c0_18 = arith.constant 0 : index
    %59 = vector.load %arg2[%c0_17, %c0_18] : memref<128x4xf32, #tpu.memory_space<vmem>>, vector<128x4xf32>
    %cst_19 = arith.constant dense<0.000000e+00> : vector<8x4xf32>
    %60 = tpu.matmul %58, %59, %cst_19 {dimension_numbers = #tpu.dot_dimension_numbers<[1], [0], [0], [1], [0, 0, 1, 1], [], []>} : vector<8x128xf32>, vector<128x4xf32>, vector<8x4xf32> -> vector<8x4xf32>
    %cst_20 = arith.constant 1.250000e-01 : f32
    %61 = vector.broadcast %cst_20 : f32 to vector<8x4xf32>
    %62 = arith.mulf %60, %61 : vector<8x4xf32>
    %c0_21 = arith.constant 0 : index
    %c0_22 = arith.constant 0 : index
    %63 = vector.load %arg3[%c0_21, %c0_22] : memref<1x4xf32, #tpu.memory_space<vmem>>, vector<1x4xf32>
    %64 = vector.broadcast %63 : vector<1x4xf32> to vector<8x4xf32>
    %65 = arith.addf %62, %64 : vector<8x4xf32>
    %c0_23 = arith.constant 0 : index
    %c0_24 = arith.constant 0 : index
    %66 = vector.load %arg4[%c0_23, %c0_24] : memref<8x4xf32, #tpu.memory_space<vmem>>, vector<8x4xf32>
    tpu.vector_store %arg4[%c0_23, %c0_24], %65 {strides = array<i32>} : memref<8x4xf32, #tpu.memory_space<vmem>>, vector<8x4xf32>,
    return
  }
  func.func @transform_0(%arg0: i32) -> (i32, i32) {
    %c0_i32 = arith.constant 0 : i32
    %c0_i32_0 = arith.constant 0 : i32
    return %arg0, %c0_i32 : i32, i32
  }
  func.func @transform_1(%arg0: i32) -> (i32, i32) {
    %c0_i32 = arith.constant 0 : i32
    %c0_i32_0 = arith.constant 0 : i32
    %c0_i32_1 = arith.constant 0 : i32
    return %c0_i32, %c0_i32_0 : i32, i32
  }
  func.func @transform_2(%arg0: i32) -> (i32, i32) {
    %c0_i32 = arith.constant 0 : i32
    %c0_i32_0 = arith.constant 0 : i32
    %c0_i32_1 = arith.constant 0 : i32
    return %c0_i32, %c0_i32_0 : i32, i32
  }
  func.func @transform_3(%arg0: i32) -> (i32, i32) {
    %c0_i32 = arith.constant 0 : i32
    %c0_i32_0 = arith.constant 0 : i32
    return %arg0, %c0_i32 : i32, i32
  }
}

</mosaic_0001>

<llo_original>
// kernel: tpu_custom_call.1
$region0: #{tpu_custom_call.1}
  #allocation0 [shape = 'u32[]', space=smem, size = 0x4, offset = 0x4, fixed_abs, tag = 'smem constant byte address 0x4 - core index']
  #allocation1 [shape = 'u32[144,128]{1,0:T(1,128)}', space=vmem, size = 0x12000, scoped, tag = 'internal scratch']
  %s0 = inlined_call_operand.vmem [shape: s32[8,8], index: 0, kind: input, shape index: {}]
  %s1 = inlined_call_operand.vmem [shape: f32[128,4], index: 1, kind: input, shape index: {}]
  %s2 = inlined_call_operand.vmem [shape: f32[1,4], index: 2, kind: input, shape index: {}]
  %s3 = inlined_call_operand.vmem [shape: f32[8,4], index: 3, kind: output, shape index: {}]
  %s4 = sld [smem:[#allocation0]]
  $region22: #{tpu_custom_call.1} parent=0
    _
  %s6 = ssub.s32 1, %s4
  %s7 = scalar_select 0, %s6, %s4
  // Predicated region
  $region2: #{tpu_custom_call.1} parent=0 // pred_check
    _
  $region3: #{tpu_custom_call.1} parent=0 // pred_check_branch
    %9 = sbr.rel (0) target = $region5
  $region4: #{tpu_custom_call.1} parent=0 // pred_region
    _
  $region5: #{tpu_custom_call.1} parent=0 // pred_fallthru
    _
  // Predicated region
  $region6: #{tpu_custom_call.1} parent=0 // pred_check
    _
  $region7: #{tpu_custom_call.1} parent=0 // pred_check_branch
    %11 = sbr.rel (0) target = $region9
  $region8: #{tpu_custom_call.1} parent=0 // pred_region
    _
  $region9: #{tpu_custom_call.1} parent=0 // pred_fallthru
    _
  // Predicated region
  $region10: #{tpu_custom_call.1} parent=0 // pred_check
    _
  $region11: #{tpu_custom_call.1} parent=0 // pred_check_branch
    %13 = sbr.rel (0) target = $region13
  $region12: #{tpu_custom_call.1} parent=0 // pred_region
    _
  $region13: #{tpu_custom_call.1} parent=0 // pred_fallthru
    _
  %v14 = vld [vmem:[%s0] sm:$0xff]
  %v15 = vlaneseq
  %v16 = vand.u32 %v15, 127
  %17 = vset.pattern.permute.xlu0 0
  %18 = vperm.xlu0 %17, %v14
  %v19 = vpop.permute.xlu0 %18
  %vm20 = vcmp.eq.s32.totalorder %v16, %v19
  %v21 = vsel %vm20, 1.0, 0.0
  %v22 = vadd.f32 %v21, 0.0
  %23 = vset.pattern.permute.xlu0 1
  %24 = vperm.xlu0 %23, %v14
  %v25 = vpop.permute.xlu0 %24
  %vm26 = vcmp.eq.s32.totalorder %v16, %v25
  %v27 = vsel %vm26, 1.0, 0.0
  %v28 = vadd.f32 %v22, %v27
  %29 = vset.pattern.permute.xlu0 2
  %30 = vperm.xlu0 %29, %v14
  %v31 = vpop.permute.xlu0 %30
  %vm32 = vcmp.eq.s32.totalorder %v16, %v31
  %v33 = vsel %vm32, 1.0, 0.0
  %v34 = vadd.f32 %v28, %v33
  %35 = vset.pattern.permute.xlu0 3
  %36 = vperm.xlu0 %35, %v14
  %v37 = vpop.permute.xlu0 %36
  %vm38 = vcmp.eq.s32.totalorder %v16, %v37
  %v39 = vsel %vm38, 1.0, 0.0
  %v40 = vadd.f32 %v34, %v39
  %41 = vset.pattern.permute.xlu0 4
  %42 = vperm.xlu0 %41, %v14
  %v43 = vpop.permute.xlu0 %42
  %vm44 = vcmp.eq.s32.totalorder %v16, %v43
  %v45 = vsel %vm44, 1.0, 0.0
  %v46 = vadd.f32 %v40, %v45
  %47 = vset.pattern.permute.xlu0 5
  %48 = vperm.xlu0 %47, %v14
  %v49 = vpop.permute.xlu0 %48
  %vm50 = vcmp.eq.s32.totalorder %v16, %v49
  %v51 = vsel %vm50, 1.0, 0.0
  %v52 = vadd.f32 %v46, %v51
  %53 = vset.pattern.permute.xlu0 6
  %54 = vperm.xlu0 %53, %v14
  %v55 = vpop.permute.xlu0 %54
  %vm56 = vcmp.eq.s32.totalorder %v16, %v55
  %v57 = vsel %vm56, 1.0, 0.0
  %v58 = vadd.f32 %v52, %v57
  %59 = vset.pattern.permute.xlu0 7
  %60 = vperm.xlu0 %59, %v14
  %v61 = vpop.permute.xlu0 %60
  %vm62 = vcmp.eq.s32.totalorder %v16, %v61
  %v63 = vsel %vm62, 1.0, 0.0
  %v64 = vadd.f32 %v58, %v63
  %v65 = vld [vmem:[%s1] sm:$0xff]
  %v66 = vld [vmem:[%s1 + $0x8] sm:$0xff]
  %v67 = vld [vmem:[%s1 + $0x10] sm:$0xff]
  %v68 = vld [vmem:[%s1 + $0x18] sm:$0xff]
  %v69 = vld [vmem:[%s1 + $0x20] sm:$0xff]
  %v70 = vld [vmem:[%s1 + $0x28] sm:$0xff]
  %v71 = vld [vmem:[%s1 + $0x30] sm:$0xff]
  %v72 = vld [vmem:[%s1 + $0x38] sm:$0xff]
  %v73 = vld [vmem:[%s1 + $0x40] sm:$0xff]
  %v74 = vld [vmem:[%s1 + $0x48] sm:$0xff]
  %v75 = vld [vmem:[%s1 + $0x50] sm:$0xff]
  %v76 = vld [vmem:[%s1 + $0x58] sm:$0xff]
  %v77 = vld [vmem:[%s1 + $0x60] sm:$0xff]
  %v78 = vld [vmem:[%s1 + $0x68] sm:$0xff]
  %v79 = vld [vmem:[%s1 + $0x70] sm:$0xff]
  %v80 = vld [vmem:[%s1 + $0x78] sm:$0xff]
  %81 = vmatprep.subr.mxu0 0.0
  %82 = vmatpush1.msra.mxu0 %v65
  %83 = vmatprep.subr.mxu0 0.0
  %84 = vmatpush1.msra.mxu0 %v66
  %85 = vmatprep.subr.mxu0 0.0
  %86 = vmatpush1.msra.mxu0 %v67
  %87 = vmatprep.subr.mxu0 0.0
  %88 = vmatpush1.msra.mxu0 %v68
  %89 = vmatprep.subr.mxu0 0.0
  %90 = vmatpush1.msra.mxu0 %v69
  %91 = vmatprep.subr.mxu0 0.0
  %92 = vmatpush1.msra.mxu0 %v70
  %93 = vmatprep.subr.mxu0 0.0
  %94 = vmatpush1.msra.mxu0 %v71
  %95 = vmatprep.subr.mxu0 0.0
  %96 = vmatpush1.msra.mxu0 %v72
  %97 = vmatprep.subr.mxu0 0.0
  %98 = vmatpush1.msra.mxu0 %v73
  %99 = vmatprep.subr.mxu0 0.0
  %100 = vmatpush1.msra.mxu0 %v74
  %101 = vmatprep.subr.mxu0 0.0
  %102 = vmatpush1.msra.mxu0 %v75
  %103 = vmatprep.subr.mxu0 0.0
  %104 = vmatpush1.msra.mxu0 %v76
  %105 = vmatprep.subr.mxu0 0.0
  %106 = vmatpush1.msra.mxu0 %v77
  %107 = vmatprep.subr.mxu0 0.0
  %108 = vmatpush1.msra.mxu0 %v78
  %109 = vmatprep.subr.mxu0 0.0
  %110 = vmatpush1.msra.mxu0 %v79
  %111 = vmatprep.subr.mxu0 0.0
  %112 = vmatpush1.msra.mxu0 %v80
  %113 = vmatprep.subr.mxu0 0.0
  %114 = vmatpush1.msra.mxu0 0.0
  %115 = vmatprep.subr.mxu0 0.0
  %116 = vmatpush1.msra.mxu0 0.0
  %117 = vmatprep.subr.mxu0 0.0
  %118 = vmatpush1.msra.mxu0 0.0
  %119 = vmatprep.subr.mxu0 0.0
  %120 = vmatpush1.msra.mxu0 0.0
  %121 = vmatprep.subr.mxu0 0.0
  %122 = vmatpush1.msra.mxu0 0.0
  %123 = vmatprep.subr.mxu0 0.0
  %124 = vmatpush1.msra.mxu0 0.0
  %125 = vmatprep.subr.mxu0 0.0
  %126 = vmatpush1.msra.mxu0 0.0
  %127 = vmatprep.subr.mxu0 0.0
  %128 = vmatpush1.msra.mxu0 0.0
  %129 = vmatprep.subr.mxu0 0.0
  %130 = vmatpush1.msra.mxu0 0.0
  %131 = vmatprep.subr.mxu0 0.0
  %132 = vmatpush1.msra.mxu0 0.0
  %133 = vmatprep.subr.mxu0 0.0
  %134 = vmatpush1.msra.mxu0 0.0
  %135 = vmatprep.subr.mxu0 0.0
  %136 = vmatpush1.msra.mxu0 0.0
  %137 = vmatprep.subr.mxu0 0.0
  %138 = vmatpush1.msra.mxu0 0.0
  %139 = vmatprep.subr.mxu0 0.0
  %140 = vmatpush1.msra.mxu0 0.0
  %141 = vmatprep.subr.mxu0 0.0
  %142 = vmatpush1.msra.mxu0 0.0
  %143 = vmatprep.subr.mxu0 0.0
  %144 = vmatpush1.msra.mxu0 0.0
  %145 = vmatprep.mubr.f32.mxu0 0.0
  %146 = vmatmul.mubr.f32.gmra.mrb[0].mxu0 %v64
  %v147 = vpop.f32.mrb[0].mxu0
  %v148 = vadd.f32 0.0, %v147
  %v149 = vpop.f32.mrb[0].mxu0
  %150 = vdwg.mxu0
  %v151 = vmul.f32 %v148, 0.125
  %v152 = vld [vmem:[%s2] sm:$0x1]
  %v154 = vlaneseq
  %v155 = vshrl.u32 %v154, 7
  %v156 = vsub.s32 0, %v155
  %v157 = vrot.slane %v152, %v156
  %v159 = vadd.f32 %v151, %v157
  %vm160 = vcmask 31744
  %161 = vst.msk [vmem:[%s3] sm:$0xff] %vm160, %v159
  // Predicated region
  $region14: #{tpu_custom_call.1} parent=0 // pred_check
    _
  $region15: #{tpu_custom_call.1} parent=0 // pred_check_branch
    %163 = sbr.rel (0) target = $region17
  $region16: #{tpu_custom_call.1} parent=0 // pred_region
    _
  $region17: #{tpu_custom_call.1} parent=0 // pred_fallthru
    _
  // Predicated region
  $region18: #{tpu_custom_call.1} parent=0 // pred_check
    _
  $region19: #{tpu_custom_call.1} parent=0 // pred_check_branch
    %165 = sbr.rel (0) target = $region21
  $region20: #{tpu_custom_call.1} parent=0 // pred_region
    _
  $region21: #{tpu_custom_call.1} parent=0 // pred_fallthru
    _

</llo_original>
